<compile_context>
chip_gen: v7x
topology: tpu7x:2x2x1
jax: 0.10.0
libtpu: 0.0.40
codegen_flags: <defaults>
</compile_context>

<pallas_src>
import jax
import jax.numpy as jnp
from jax import lax
from jax.experimental import pallas as pl
from jax.experimental.pallas import tpu as pltpu

LANES = 128
MAX_BLOCK_ROWS = 2048   # 2048 * 128 * 4 B = 1 MiB per input tile
EPS = 1e-8


def _round_up(x, m):
    return ((x + m - 1) // m) * m


def _make_kernel(block_rows, num_steps, valid_rows_last):
    """Build a Charbonnier-sum kernel specialized to static tiling params."""
    ragged = valid_rows_last != block_rows  # Python bool, decided at trace time

    def kernel(yhat_ref, y_ref, out_ref, acc_ref):
        step = pl.program_id(0)

        @pl.when(step == 0)
        def _():
            acc_ref[...] = jnp.zeros_like(acc_ref)

        diff = yhat_ref[...].astype(jnp.float32) - y_ref[...].astype(jnp.float32)
        val = jnp.sqrt(diff * diff + jnp.float32(EPS))

        def accumulate(v):
            # (block_rows, 128) -> (block_rows//8, 8, 128); summing the leading
            # axis is vreg-wise VPU adds into the resident (8, 128) accumulator
            # (no per-step cross-lane XLU reduction).
            acc_ref[...] += v.reshape(block_rows // 8, 8, LANES).sum(axis=0)

        if ragged:
            is_last = step == num_steps - 1

            @pl.when(jnp.logical_not(is_last))
            def _():
                accumulate(val)

            @pl.when(is_last)
            def _():
                # Mask garbage rows of the ragged final block (static threshold).
                row_ids = lax.broadcasted_iota(jnp.int32, (block_rows, LANES), 0)
                accumulate(jnp.where(row_ids < valid_rows_last, val,
                                     jnp.float32(0.0)))
        else:
            accumulate(val)

        @pl.when(step == num_steps - 1)
        def _():
            out_ref[...] = jnp.sum(acc_ref[...]).reshape(1, 1)

    return kernel


@jax.jit
def charbonnier_loss(yhat, y):
    """Pallas implementation of CharbonierLoss.forward (returns scalar f32)."""
    assert yhat.shape == y.shape
    h, w = y.shape[-2], y.shape[-1]
    # Mirror the module's .view(-1, 3, h, w) constraint (does not change mean).
    assert (yhat.size % (3 * h * w)) == 0, "total elements must reshape to (-1,3,h,w)"

    n = yhat.size
    yhat_flat = yhat.reshape(-1)
    y_flat = y.reshape(-1)

    # Only pad if the flat length is not already a multiple of 128 lanes
    # (rare for image tensors).  Zero-pad elements each contribute exactly
    # sqrt(EPS) to the sum, corrected for below.  No row-tile padding is done:
    # the last grid block may be ragged and is masked inside the kernel.
    n_lane_pad = (-n) % LANES
    if n_lane_pad:
        yhat_flat = jnp.pad(yhat_flat, (0, n_lane_pad))
        y_flat = jnp.pad(y_flat, (0, n_lane_pad))
    rows = (n + n_lane_pad) // LANES

    # Big, bandwidth-friendly tiles; multiple of 16 rows keeps bf16 inputs
    # sublane-pack aligned as well.  2 inputs x 2 buffers x 1 MiB = 4 MiB VMEM,
    # safe on v5e (16 MiB scoped), v6e (32 MiB) and v7x (32 MiB scoped / 64 MiB).
    block_rows = min(MAX_BLOCK_ROWS, _round_up(rows, 16))
    num_steps = pl.cdiv(rows, block_rows)
    valid_rows_last = rows - (num_steps - 1) * block_rows

    yhat2d = yhat_flat.reshape(rows, LANES)
    y2d = y_flat.reshape(rows, LANES)

    kernel = _make_kernel(block_rows, num_steps, valid_rows_last)

    total = pl.pallas_call(
        kernel,
        out_shape=jax.ShapeDtypeStruct((1, 1), jnp.float32),
        grid=(num_steps,),
        in_specs=[
            pl.BlockSpec((block_rows, LANES), lambda i: (i, 0)),
            pl.BlockSpec((block_rows, LANES), lambda i: (i, 0)),
        ],
        out_specs=pl.BlockSpec((1, 1), lambda i: (0, 0)),
        scratch_shapes=[pltpu.VMEM((8, LANES), jnp.float32)],
        compiler_params=pltpu.CompilerParams(
            dimension_semantics=("arbitrary",)
        ),
    )(yhat2d, y2d)

    total = total[0, 0]
    if n_lane_pad:
        # Each zero-pad element contributed sqrt(0 + EPS); remove it.
        total = total - jnp.float32(n_lane_pad) * jnp.sqrt(jnp.float32(EPS))
    return (total / jnp.float32(n)).astype(jnp.float32)


if __name__ == "__main__":
    key = jax.random.PRNGKey(0)
    k1, k2 = jax.random.split(key)
    # Shapes consistent with the module: channel dim reshapes to 3.
    yhat = jax.random.normal(k1, (2, 3, 16, 16), dtype=jnp.float32)
    y = jax.random.normal(k2, (2, 3, 16, 16), dtype=jnp.float32)

    loss = charbonnier_loss(yhat, y)
    jax.block_until_ready(loss)

    # Sanity check against a pure-JAX reference.
    ref = jnp.mean(jnp.sqrt((yhat - y) ** 2 + EPS))
    assert jnp.allclose(loss, ref, rtol=1e-5, atol=1e-6), (loss, ref)

    print("KERNEL_OK")
</pallas_src>

<mosaic_0001>
module attributes {stable_mosaic.version = 11 : i64} {
  func.func @kernel(%arg0: i32, %arg1: memref<16x128xf32, #tpu.memory_space<vmem>>, %arg2: memref<16x128xf32, #tpu.memory_space<vmem>>, %arg3: memref<1x1xf32, #tpu.memory_space<vmem>>, %arg4: memref<8x128xf32, #tpu.memory_space<vmem>>) attributes {dimension_semantics = [#tpu.dimension_semantics<arbitrary>], iteration_bounds = array<i64: 1>, scalar_prefetch = 0 : i64, scratch_operands = 1 : i64, tpu.core_type = #tpu.core_type<tc>, window_params = [{transform_indices = @transform_0, window_bounds = array<i64: 16, 128>}, {transform_indices = @transform_1, window_bounds = array<i64: 16, 128>}, {pipeline_mode = #tpu.pipeline_mode<synchronous>, transform_indices = @transform_2, window_bounds = array<i64: 1, 1>}]} {
    %c0_i32 = arith.constant 0 : i32
    %0 = arith.cmpi eq, %arg0, %c0_i32 : i32
    %1 = arith.extui %0 : i1 to i32
    %c0_i32_0 = arith.constant 0 : i32
    %2 = arith.cmpi ne, %1, %c0_i32_0 : i32
    scf.if %2 {
      %cst_9 = arith.constant 0.000000e+00 : f32
      %19 = vector.broadcast %cst_9 : f32 to vector<8x128xf32>
      %c0_10 = arith.constant 0 : index
      %c0_11 = arith.constant 0 : index
      %20 = vector.load %arg4[%c0_10, %c0_11] : memref<8x128xf32, #tpu.memory_space<vmem>>, vector<8x128xf32>
      tpu.vector_store %arg4[%c0_10, %c0_11], %19 {strides = array<i32>} : memref<8x128xf32, #tpu.memory_space<vmem>>, vector<8x128xf32>,
    } else {
    }
    %c0 = arith.constant 0 : index
    %c0_1 = arith.constant 0 : index
    %3 = vector.load %arg1[%c0, %c0_1] : memref<16x128xf32, #tpu.memory_space<vmem>>, vector<16x128xf32>
    %c0_2 = arith.constant 0 : index
    %c0_3 = arith.constant 0 : index
    %4 = vector.load %arg2[%c0_2, %c0_3] : memref<16x128xf32, #tpu.memory_space<vmem>>, vector<16x128xf32>
    %5 = arith.subf %3, %4 : vector<16x128xf32>
    %6 = arith.mulf %5, %5 : vector<16x128xf32>
    %cst = arith.constant 9.99999993E-9 : f32
    %7 = vector.broadcast %cst : f32 to vector<16x128xf32>
    %8 = arith.addf %6, %7 : vector<16x128xf32>
    %9 = math.sqrt %8 : vector<16x128xf32>
    %c0_i32_4 = arith.constant 0 : i32
    %10 = arith.cmpi eq, %arg0, %c0_i32_4 : i32
    %true = arith.constant true
    %11 = arith.xori %10, %true : i1
    %12 = arith.extui %11 : i1 to i32
    %c0_i32_5 = arith.constant 0 : i32
    %13 = arith.cmpi ne, %12, %c0_i32_5 : i32
    scf.if %13 {
      %c0_9 = arith.constant 0 : index
      %c0_10 = arith.constant 0 : index
      %19 = vector.load %arg4[%c0_9, %c0_10] : memref<8x128xf32, #tpu.memory_space<vmem>>, vector<8x128xf32>
      %20 = vector.shape_cast %9 : vector<16x128xf32> to vector<2x8x128xf32>
      %cst_11 = arith.constant dense<0.000000e+00> : vector<8x128xf32>
      %21 = vector.multi_reduction <add>, %20, %cst_11 [0] : vector<2x8x128xf32> to vector<8x128xf32>
      %22 = arith.addf %19, %21 : vector<8x128xf32>
      %c0_12 = arith.constant 0 : index
      %c0_13 = arith.constant 0 : index
      %23 = vector.load %arg4[%c0_12, %c0_13] : memref<8x128xf32, #tpu.memory_space<vmem>>, vector<8x128xf32>
      tpu.vector_store %arg4[%c0_12, %c0_13], %22 {strides = array<i32>} : memref<8x128xf32, #tpu.memory_space<vmem>>, vector<8x128xf32>,
    } else {
    }
    %14 = arith.extui %10 : i1 to i32
    %c0_i32_6 = arith.constant 0 : i32
    %15 = arith.cmpi ne, %14, %c0_i32_6 : i32
    scf.if %15 {
      %19 = tpu.iota {dimensions = array<i32: 0>} : vector<16x128xi32>
      %c12_i32 = arith.constant 12 : i32
      %20 = vector.broadcast %c12_i32 : i32 to vector<16x128xi32>
      %21 = arith.cmpi slt, %19, %20 : vector<16x128xi32>
      %cst_9 = arith.constant 0.000000e+00 : f32
      %22 = vector.broadcast %cst_9 : f32 to vector<16x128xf32>
      %23 = arith.select %21, %9, %22 : vector<16x128xi1>, vector<16x128xf32>
      %c0_10 = arith.constant 0 : index
      %c0_11 = arith.constant 0 : index
      %24 = vector.load %arg4[%c0_10, %c0_11] : memref<8x128xf32, #tpu.memory_space<vmem>>, vector<8x128xf32>
      %25 = vector.shape_cast %23 : vector<16x128xf32> to vector<2x8x128xf32>
      %cst_12 = arith.constant dense<0.000000e+00> : vector<8x128xf32>
      %26 = vector.multi_reduction <add>, %25, %cst_12 [0] : vector<2x8x128xf32> to vector<8x128xf32>
      %27 = arith.addf %24, %26 : vector<8x128xf32>
      %c0_13 = arith.constant 0 : index
      %c0_14 = arith.constant 0 : index
      %28 = vector.load %arg4[%c0_13, %c0_14] : memref<8x128xf32, #tpu.memory_space<vmem>>, vector<8x128xf32>
      tpu.vector_store %arg4[%c0_13, %c0_14], %27 {strides = array<i32>} : memref<8x128xf32, #tpu.memory_space<vmem>>, vector<8x128xf32>,
    } else {
    }
    %c0_i32_7 = arith.constant 0 : i32
    %16 = arith.cmpi eq, %arg0, %c0_i32_7 : i32
    %17 = arith.extui %16 : i1 to i32
    %c0_i32_8 = arith.constant 0 : i32
    %18 = arith.cmpi ne, %17, %c0_i32_8 : i32
    scf.if %18 {
      %c0_9 = arith.constant 0 : index
      %c0_10 = arith.constant 0 : index
      %19 = vector.load %arg4[%c0_9, %c0_10] : memref<8x128xf32, #tpu.memory_space<vmem>>, vector<8x128xf32>
      %20 = vector.shape_cast %19 : vector<8x128xf32> to vector<1x8x128xf32>
      %cst_11 = arith.constant dense<0.000000e+00> : vector<1xf32>
      %21 = vector.multi_reduction <add>, %20, %cst_11 [1, 2] : vector<1x8x128xf32> to vector<1xf32>
      %22 = vector.shape_cast %21 : vector<1xf32> to vector<1x1x1xf32>
      %23 = vector.extract %22[0, 0, 0] : f32 from vector<1x1x1xf32>
      %24 = vector.broadcast %23 : f32 to vector<1x1xf32>
      %c0_12 = arith.constant 0 : index
      %c0_13 = arith.constant 0 : index
      %25 = vector.load %arg3[%c0_12, %c0_13] : memref<1x1xf32, #tpu.memory_space<vmem>>, vector<1x1xf32>
      tpu.vector_store %arg3[%c0_12, %c0_13], %24 {strides = array<i32>} : memref<1x1xf32, #tpu.memory_space<vmem>>, vector<1x1xf32>,
    } else {
    }
    return
  }
  func.func @transform_0(%arg0: i32) -> (i32, i32) {
    %c0_i32 = arith.constant 0 : i32
    %c0_i32_0 = arith.constant 0 : i32
    return %arg0, %c0_i32 : i32, i32
  }
  func.func @transform_1(%arg0: i32) -> (i32, i32) {
    %c0_i32 = arith.constant 0 : i32
    %c0_i32_0 = arith.constant 0 : i32
    return %arg0, %c0_i32 : i32, i32
  }
  func.func @transform_2(%arg0: i32) -> (i32, i32) {
    %c0_i32 = arith.constant 0 : i32
    %c0_i32_0 = arith.constant 0 : i32
    %c0_i32_1 = arith.constant 0 : i32
    return %c0_i32, %c0_i32_0 : i32, i32
  }
}

</mosaic_0001>

<llo_original>
// kernel: charbonnier_loss.1
$region0: #{charbonnier_loss.1}
  #allocation0 [shape = 'u32[]', space=smem, size = 0x4, offset = 0x4, fixed_abs, tag = 'smem constant byte address 0x4 - core index']
  #allocation1 [shape = 'u32[144,128]{1,0:T(1,128)}', space=vmem, size = 0x12000, scoped, tag = 'internal scratch']
  #allocation2 [shape = 'f32[8,128]{1,0:T(8,128)}', space=vmem, size = 0x1000, scoped, tag = 'scratch operand']
  %s0 = inlined_call_operand.vmem [shape: f32[12,128], index: 0, kind: input, shape index: {}]
  %s1 = inlined_call_operand.vmem [shape: f32[12,128], index: 1, kind: input, shape index: {}]
  %s2 = inlined_call_operand.hbm [shape: f32[1,1], index: 2, kind: output, shape index: {}]
  %s3 = sld [smem:[#allocation0]]
  $region30: #{charbonnier_loss.1} parent=0
    _
  %s5 = ssub.s32 1, %s3
  %s6 = scalar_select 0, %s5, %s3
  $region1: #{charbonnier_loss.1} parent=0
    #allocation3 [shape = 'u8[512]{0}', space=vmem, size = 0x400, scoped, tag = 'output window, operand 0, single buffered']
    #allocation4 [shape = 's32[1]{0}', space=sflag, size = 0x4, scoped, tag = 'scoped memory for charbonnier_loss.1']
    %7 = vsyncpa [#allocation4], 0
    // Predicated region
    $region2: #{charbonnier_loss.1} parent=1 // pred_check
      _
    $region3: #{charbonnier_loss.1} parent=1 // pred_check_branch
      %9 = sbr.rel (0) target = $region5
    $region4: #{charbonnier_loss.1} parent=1 // pred_region
      _
    $region5: #{charbonnier_loss.1} parent=1 // pred_fallthru
      _
    // Predicated region
    $region6: #{charbonnier_loss.1} parent=1 // pred_check
      _
    $region7: #{charbonnier_loss.1} parent=1 // pred_check_branch
      %11 = sbr.rel (0) target = $region9
    $region8: #{charbonnier_loss.1} parent=1 // pred_region
      _
    $region9: #{charbonnier_loss.1} parent=1 // pred_fallthru
      _
    %p12 = scmp.eq.s32.totalorder 0, 0
    // Predicated region
    $region10: #{charbonnier_loss.1} parent=1 // pred_check
      %p13 = pneg %p12
    $region11: #{charbonnier_loss.1} parent=1 // pred_check_branch
      %15 = sbr.rel (%p13) target = $region13
    $region12: #{charbonnier_loss.1} parent=1 // pred_region
      %16 = vst [vmem:[#allocation2] sm:$0xff] 0.0
    $region13: #{charbonnier_loss.1} parent=1 // pred_fallthru
      _
    %v17 = vld [vmem:[%s0] sm:$0xff]
    %v18 = vld [vmem:[%s0 + $0x8] sm:$0xff]
    %v19 = vld [vmem:[%s1] sm:$0xff]
    %v20 = vld [vmem:[%s1 + $0x8] sm:$0xff]
    %v21 = vsub.f32 %v17, %v19
    %v22 = vsub.f32 %v18, %v20
    %v23 = vmul.f32 %v21, %v21
    %v24 = vmul.f32 %v22, %v22
    %v25 = vadd.f32 %v23, 1e-08
    %v26 = vadd.f32 %v24, 1e-08
    %v27 = vrsqrt.pop %v25
    %v28 = vmul.f32 %v25, %v27
    %vm29 = vcmp.eq.f32.partialorder %v25, inf
    %v30 = vsel %vm29, %v25, %v28
    %vm31 = vcmp.eq.f32.partialorder %v25, 0.0
    %v32 = vand.u32 %v25, 2147483648
    %v33 = vsel %vm31, %v32, %v30
    %v34 = vrsqrt.pop %v26
    %v35 = vmul.f32 %v26, %v34
    %vm36 = vcmp.eq.f32.partialorder %v26, inf
    %v37 = vsel %vm36, %v26, %v35
    %vm38 = vcmp.eq.f32.partialorder %v26, 0.0
    %v39 = vand.u32 %v26, 2147483648
    %v40 = vsel %vm38, %v39, %v37
    %p41 = scmp.ne.s32.totalorder 0, 0
    // Predicated region
    $region14: #{charbonnier_loss.1} parent=1 // pred_check
      %p42 = pneg %p41
    $region15: #{charbonnier_loss.1} parent=1 // pred_check_branch
      %44 = sbr.rel (%p42) target = $region17
    $region16: #{charbonnier_loss.1} parent=1 // pred_region
      %v45 = vld [vmem:[#allocation2] sm:$0xff]
      %v46 = vadd.f32 %v33, %v40
      %v47 = vadd.f32 %v45, %v46
      %48 = vst [vmem:[#allocation2] sm:$0xff] %v47
    $region17: #{charbonnier_loss.1} parent=1 // pred_fallthru
      _
    // Predicated region
    $region18: #{charbonnier_loss.1} parent=1 // pred_check
      %p49 = pneg %p12
    $region19: #{charbonnier_loss.1} parent=1 // pred_check_branch
      %51 = sbr.rel (%p49) target = $region21
    $region20: #{charbonnier_loss.1} parent=1 // pred_region
      %v52 = vlaneseq
      %v53 = vshrl.u32 %v52, 7
      %v54 = vadd.s32 %v53, 8
      %vm55 = vcmp.lt.s32.totalorder %v53, 12
      %vm56 = vcmp.lt.s32.totalorder %v54, 12
      %v57 = vsel %vm55, %v33, 0.0
      %v58 = vsel %vm56, %v40, 0.0
      %v59 = vld [vmem:[#allocation2] sm:$0xff]
      %v60 = vadd.f32 %v57, %v58
      %v61 = vadd.f32 %v59, %v60
      %62 = vst [vmem:[#allocation2] sm:$0xff] %v61
      %v63 = vld [vmem:[#allocation2] sm:$0xff]
      %64 = vadd.xlane.f32.xlu0 %v63
      %v65 = vpop.xlane.xlu0 %64
      %v66 = vrot.slane %v65, 4
      %v67 = vadd.f32 %v65, %v66
      %v68 = vrot.slane %v67, 2
      %v69 = vadd.f32 %v67, %v68
      %v70 = vrot.slane %v69, 1
      %v71 = vadd.f32 %v69, %v70
      %s72 = vtos %v71
      %v73 = vstv %s72
      %vm74 = vcmask 0
      %75 = vst.msk [vmem:[#allocation3] sm:$0x1] %vm74, %v73
    $region21: #{charbonnier_loss.1} parent=1 // pred_fallthru
      _
    // Predicated region
    $region22: #{charbonnier_loss.1} parent=1 // pred_check
      _
    $region23: #{charbonnier_loss.1} parent=1 // pred_check_branch
      %77 = sbr.rel (0) target = $region25
    $region24: #{charbonnier_loss.1} parent=1 // pred_region
      %s79 = ssub.s32 16, 16
      %80 = vsyncadd [#allocation4], %s79
      %s82 = sshll.u32 [#allocation3], 4
      %s83 = int_to_ptr.vmem [resolvable:$true] %s82
      %85 = dma.vmem_to_hbm [thread:$0]  %s83, 16, %s2, [#allocation4]
    $region25: #{charbonnier_loss.1} parent=1 // pred_fallthru
      _
    // Predicated region
    $region26: #{charbonnier_loss.1} parent=1 // pred_check
      _
    $region27: #{charbonnier_loss.1} parent=1 // pred_check_branch
      %87 = sbr.rel (0) target = $region29
    $region28: #{charbonnier_loss.1} parent=1 // pred_region
      %88 = dma.done [#allocation4], 16
    $region29: #{charbonnier_loss.1} parent=1 // pred_fallthru
      _
    %89 = vsyncpa [#allocation4], 1

</llo_original>
